<compile_context>
chip_gen: v7x
topology: tpu7x:2x2x1
jax: 0.10.0
libtpu: 0.0.40
codegen_flags: <defaults>
</compile_context>

<pallas_src>
import functools

import jax
import jax.numpy as jnp
from jax.experimental import pallas as pl
from jax.experimental.pallas import tpu as pltpu


def _round_up(x, m):
    return ((x + m - 1) // m) * m


def _log1p(x):
    # Accurate log1p from log/where only (robust Mosaic lowering): for tiny x,
    # f32 log(1+x) rounds to 0; use the series x - x^2/2 + x^3/3 instead.
    series = x * (1.0 - x * (0.5 - x * (1.0 / 3.0)))
    return jnp.where(x < 1e-4, series, jnp.log(1.0 + x))


def _proxy_anchor_kernel(x_ref, p_ref, t_ref, o_ref, p_acc, n_acc,
                         *, am, nb_classes, batch, batch_tile, class_tile,
                         mm_dtype):
    ci = pl.program_id(0)            # class-tile index ("parallel")
    bi = pl.program_id(1)            # batch-tile index ("arbitrary" reduction)

    @pl.when(bi == 0)
    def _init():
        p_acc[...] = jnp.zeros_like(p_acc)
        n_acc[...] = jnp.zeros_like(n_acc)

    # L2-normalize the streamed batch tile (one rsqrt per row).
    x = x_ref[...].astype(jnp.float32)                       # (tb, D)
    x_ss = jnp.maximum(jnp.sum(x * x, axis=1, keepdims=True), 1e-24)
    xn = (x * jax.lax.rsqrt(x_ss)).astype(mm_dtype)

    # Proxies arrive pre-normalized and pre-scaled by alpha, so this matmul
    # already yields alpha * cos; contraction on the last dim of both operands.
    cos_s = jax.lax.dot_general(
        xn, p_ref[...],
        dimension_numbers=(((1,), (1,)), ((), ())),
        preferred_element_type=jnp.float32)                  # (tb, tc)

    t = t_ref[...]                                           # (tb, 1) int32
    class_ids = (ci * class_tile
                 + jax.lax.broadcasted_iota(jnp.int32, (1, class_tile), 1))
    is_pos = class_ids == t                                  # (tb, tc)

    # exp(-alpha (cos - mrg)) for positives, exp(alpha (cos + mrg)) otherwise.
    e = jnp.exp(jnp.where(is_pos, am - cos_s, cos_s + am))

    if batch % batch_tile != 0:
        # Ragged last batch tile: zero contributions from out-of-range rows
        # (also squashes any NaN/Inf coming from uninitialized OOB reads).
        row_ids = bi * batch_tile + jax.lax.broadcasted_iota(
            jnp.int32, (batch_tile, 1), 0)
        e = jnp.where(row_ids < batch, e, 0.0)

    p_acc[...] += jnp.sum(jnp.where(is_pos, e, 0.0), axis=0, keepdims=True)
    n_acc[...] += jnp.sum(jnp.where(is_pos, 0.0, e), axis=0, keepdims=True)

    @pl.when(bi == pl.num_programs(1) - 1)
    def _finalize():
        class_valid = class_ids < nb_classes                 # (1, tc)
        pos_logs = _log1p(p_acc[...])                        # padded lanes: log1p(0)=0
        neg_logs = jnp.where(class_valid, _log1p(n_acc[...]), 0.0)
        o_ref[0, 0] = jnp.sum(pos_logs)
        o_ref[0, 1] = jnp.sum(neg_logs)


def proxy_anchor_loss(X, T, proxies, *, mrg=0.1, alpha=32.0,
                      batch_tile=256, class_tile=512, matmul_dtype=None):
    """X: (B, D) float, T: (B,) int labels, proxies: (C, D) float -> scalar loss."""
    B, D = X.shape
    C, D2 = proxies.shape
    assert D == D2, "embedding dims must match"

    # bf16 MXU pays off once the matmul is not hidden under the exp/VPU work
    # (large D); at small D keep f32 so alpha does not amplify bf16 rounding.
    if matmul_dtype is None:
        matmul_dtype = jnp.bfloat16 if D >= 256 else jnp.float32
    mm_size = jnp.dtype(matmul_dtype).itemsize

    # Class tiling: lane-dense, 256-aligned whenever padding is needed anyway.
    if C <= 128:
        tc = 128
    else:
        tc = min(_round_up(C, 256), _round_up(class_tile, 256))
    c_pad = _round_up(C, tc)
    n_ct = c_pad // tc

    # Batch tiling: largest tile fitting a conservative scoped-VMEM budget.
    x_sublane = 8 if X.dtype.itemsize >= 4 else 16
    tb = min(batch_tile, _round_up(B, x_sublane))

    def _live_bytes(tb_):
        return (2 * tb_ * D * X.dtype.itemsize     # X double-buffered
                + 2 * tc * D * mm_size             # proxy tile double-buffered
                + 8 * tb_ * tc * 4                 # cos/e/select temporaries
                + 4 * tc * 4 + 2 * tb_ * 8)        # accumulators, labels
    while tb > 128 and _live_bytes(tb) > (24 << 20):
        tb = max(128, _round_up(tb // 2, x_sublane))
    n_bt = pl.cdiv(B, tb)

    # Hoisted out of the kernel: proxy L2-normalization with alpha folded in,
    # done once in JAX over the small (C, D) parameter, then zero-padded.
    p32 = proxies.astype(jnp.float32)
    p_ss = jnp.maximum(jnp.sum(p32 * p32, axis=1, keepdims=True), 1e-24)
    p_prep = (float(alpha) * p32 * jax.lax.rsqrt(p_ss)).astype(matmul_dtype)
    p_pad = jnp.zeros((c_pad, D), matmul_dtype).at[:C].set(p_prep)

    # Labels as a (B, 1) int32 column; X itself is passed through untouched
    # (no wrapper-side padding pass over the big batch operand).
    t2d = T.reshape(B, 1).astype(jnp.int32)

    kernel = functools.partial(
        _proxy_anchor_kernel,
        am=float(alpha) * float(mrg), nb_classes=C, batch=B,
        batch_tile=tb, class_tile=tc, mm_dtype=matmul_dtype)

    cost = pl.CostEstimate(
        flops=int(2 * B * c_pad * D + 6 * B * c_pad),
        transcendentals=int(B * c_pad + B + 2 * c_pad),
        bytes_accessed=int(X.dtype.itemsize * B * D
                           + mm_size * n_bt * c_pad * D
                           + 4 * B + 8 * n_ct))

    vmem_limit = int(min(max(2 * _live_bytes(tb), 24 << 20), 64 << 20))

    parts = pl.pallas_call(
        kernel,
        out_shape=jax.ShapeDtypeStruct((n_ct, 2), jnp.float32),
        grid_spec=pltpu.PrefetchScalarGridSpec(
            num_scalar_prefetch=0,
            grid=(n_ct, n_bt),
            in_specs=[
                pl.BlockSpec((tb, D), lambda c, b: (b, 0)),    # X batch tile
                pl.BlockSpec((tc, D), lambda c, b: (c, 0)),    # proxy class tile
                pl.BlockSpec((tb, 1), lambda c, b: (b, 0)),    # labels tile
            ],
            out_specs=pl.BlockSpec((1, 2), lambda c, b: (c, 0),
                                   memory_space=pltpu.MemorySpace.SMEM),
            scratch_shapes=[
                pltpu.VMEM((1, tc), jnp.float32),   # per-class positive-sim sums
                pltpu.VMEM((1, tc), jnp.float32),   # per-class negative-sim sums
            ]),
        compiler_params=pltpu.CompilerParams(
            dimension_semantics=("parallel", "arbitrary"),
            vmem_limit_bytes=vmem_limit),
        cost_estimate=cost,
    )(X, p_pad, t2d)

    # Tiny JAX epilogue: combine per-class-tile partial sums; num_valid is
    # computed here from T instead of with an in-kernel count accumulator.
    counts = jnp.zeros((C,), jnp.int32).at[T.astype(jnp.int32)].add(1)
    num_valid = jnp.sum(counts > 0).astype(jnp.float32)
    pos_term = jnp.sum(parts[:, 0]) / num_valid
    neg_term = jnp.sum(parts[:, 1]) / float(C)
    return pos_term + neg_term


if __name__ == "__main__":
    # Small deterministic example consistent with the module's forward:
    # batch=8, embedding=32, classes=8.
    nb_classes, sz_embed, batch = 8, 32, 8
    mrg, alpha = 0.1, 32.0

    key = jax.random.PRNGKey(0)
    kx, kp, kt = jax.random.split(key, 3)

    # Proxies: kaiming_normal_(mode='fan_out') on a (C, D) tensor ->
    # std = sqrt(2 / fan_out) with fan_out = nb_classes.
    proxies = jax.random.normal(kp, (nb_classes, sz_embed), jnp.float32) * jnp.sqrt(
        2.0 / nb_classes)

    X = jax.random.normal(kx, (batch, sz_embed), jnp.float32)
    T = jax.random.randint(kt, (batch,), 0, nb_classes, dtype=jnp.int32)

    loss = proxy_anchor_loss(X, T, proxies, mrg=mrg, alpha=alpha)
    jax.block_until_ready(loss)

    # Pure-JAX reference of the same math.
    def ref(X, T, P):
        xn = X / jnp.maximum(jnp.linalg.norm(X, axis=1, keepdims=True), 1e-12)
        pn = P / jnp.maximum(jnp.linalg.norm(P, axis=1, keepdims=True), 1e-12)
        cos = xn @ pn.T
        oh = jax.nn.one_hot(T, nb_classes, dtype=jnp.float32)
        pos_exp = jnp.exp(-alpha * (cos - mrg))
        neg_exp = jnp.exp(alpha * (cos + mrg))
        p_sum = jnp.sum(oh * pos_exp, axis=0)
        n_sum = jnp.sum((1 - oh) * neg_exp, axis=0)
        nv = jnp.sum((jnp.sum(oh, axis=0) != 0).astype(jnp.float32))
        return jnp.sum(jnp.log1p(p_sum)) / nv + jnp.sum(jnp.log1p(n_sum)) / nb_classes

    ref_loss = ref(X, T, proxies)
    assert jnp.allclose(loss, ref_loss, rtol=1e-4, atol=1e-5), (loss, ref_loss)

    print("KERNEL_OK")
</pallas_src>

<mosaic_0001>
module attributes {stable_mosaic.version = 11 : i64} {
  func.func @_proxy_anchor_kernel(%arg0: i32, %arg1: i32, %arg2: memref<8x32xf32, #tpu.memory_space<vmem>>, %arg3: memref<128x32xf32, #tpu.memory_space<vmem>>, %arg4: memref<8x1xi32, #tpu.memory_space<vmem>>, %arg5: memref<1x2xf32, #tpu.memory_space<smem>>, %arg6: memref<1x128xf32, #tpu.memory_space<vmem>>, %arg7: memref<1x128xf32, #tpu.memory_space<vmem>>) attributes {dimension_semantics = [#tpu.dimension_semantics<parallel>, #tpu.dimension_semantics<arbitrary>], iteration_bounds = array<i64: 1, 1>, scalar_prefetch = 0 : i64, scratch_operands = 2 : i64, tpu.core_type = #tpu.core_type<tc>, window_params = [{transform_indices = @transform_0, window_bounds = array<i64: 8, 32>}, {transform_indices = @transform_1, window_bounds = array<i64: 128, 32>}, {transform_indices = @transform_2, window_bounds = array<i64: 8, 1>}, {transform_indices = @transform_3, window_bounds = array<i64: 1, 2>}]} {
    %c0_i32 = arith.constant 0 : i32
    %0 = arith.cmpi eq, %arg1, %c0_i32 : i32
    %1 = arith.extui %0 : i1 to i32
    %c0_i32_0 = arith.constant 0 : i32
    %2 = arith.cmpi ne, %1, %c0_i32_0 : i32
    scf.if %2 {
      %cst_24 = arith.constant 0.000000e+00 : f32
      %45 = vector.broadcast %cst_24 : f32 to vector<1x128xf32>
      %c0_25 = arith.constant 0 : index
      %c0_26 = arith.constant 0 : index
      %46 = vector.load %arg6[%c0_25, %c0_26] : memref<1x128xf32, #tpu.memory_space<vmem>>, vector<1x128xf32>
      tpu.vector_store %arg6[%c0_25, %c0_26], %45 {strides = array<i32>} : memref<1x128xf32, #tpu.memory_space<vmem>>, vector<1x128xf32>,
      %cst_27 = arith.constant 0.000000e+00 : f32
      %47 = vector.broadcast %cst_27 : f32 to vector<1x128xf32>
      %c0_28 = arith.constant 0 : index
      %c0_29 = arith.constant 0 : index
      %48 = vector.load %arg7[%c0_28, %c0_29] : memref<1x128xf32, #tpu.memory_space<vmem>>, vector<1x128xf32>
      tpu.vector_store %arg7[%c0_28, %c0_29], %47 {strides = array<i32>} : memref<1x128xf32, #tpu.memory_space<vmem>>, vector<1x128xf32>,
    } else {
    }
    %c0 = arith.constant 0 : index
    %c0_1 = arith.constant 0 : index
    %3 = vector.load %arg2[%c0, %c0_1] : memref<8x32xf32, #tpu.memory_space<vmem>>, vector<8x32xf32>
    %4 = arith.mulf %3, %3 : vector<8x32xf32>
    %cst = arith.constant dense<0.000000e+00> : vector<8xf32>
    %5 = vector.multi_reduction <add>, %4, %cst [1] : vector<8x32xf32> to vector<8xf32>
    %6 = vector.shape_cast %5 : vector<8xf32> to vector<8x1xf32>
    %cst_2 = arith.constant 1.000000e-24 : f32
    %7 = vector.broadcast %cst_2 : f32 to vector<8x1xf32>
    %8 = arith.maximumf %6, %7 : vector<8x1xf32>
    %9 = math.rsqrt %8 : vector<8x1xf32>
    %10 = vector.broadcast %9 : vector<8x1xf32> to vector<8x32xf32>
    %11 = arith.mulf %3, %10 : vector<8x32xf32>
    %c0_3 = arith.constant 0 : index
    %c0_4 = arith.constant 0 : index
    %12 = vector.load %arg3[%c0_3, %c0_4] : memref<128x32xf32, #tpu.memory_space<vmem>>, vector<128x32xf32>
    %cst_5 = arith.constant dense<0.000000e+00> : vector<8x128xf32>
    %13 = tpu.matmul %11, %12, %cst_5 {dimension_numbers = #tpu.dot_dimension_numbers<[1], [1], [0], [0], [0, 0, 1, 0], [], []>} : vector<8x32xf32>, vector<128x32xf32>, vector<8x128xf32> -> vector<8x128xf32>
    %c0_6 = arith.constant 0 : index
    %c0_7 = arith.constant 0 : index
    %14 = vector.load %arg4[%c0_6, %c0_7] : memref<8x1xi32, #tpu.memory_space<vmem>>, vector<8x1xi32>
    %c128_i32 = arith.constant 128 : i32
    %15 = arith.muli %arg0, %c128_i32 : i32
    %16 = tpu.iota {dimensions = array<i32: 1>} : vector<1x128xi32>
    %17 = vector.broadcast %15 : i32 to vector<1x128xi32>
    %18 = arith.addi %17, %16 : vector<1x128xi32>
    %19 = vector.broadcast %18 : vector<1x128xi32> to vector<8x128xi32>
    %20 = vector.broadcast %14 : vector<8x1xi32> to vector<8x128xi32>
    %21 = arith.cmpi eq, %19, %20 : vector<8x128xi32>
    %cst_8 = arith.constant 3.200000e+00 : f32
    %22 = vector.broadcast %cst_8 : f32 to vector<8x128xf32>
    %23 = arith.subf %22, %13 : vector<8x128xf32>
    %cst_9 = arith.constant 3.200000e+00 : f32
    %24 = vector.broadcast %cst_9 : f32 to vector<8x128xf32>
    %25 = arith.addf %13, %24 : vector<8x128xf32>
    %26 = arith.select %21, %23, %25 : vector<8x128xi1>, vector<8x128xf32>
    %27 = math.exp %26 : vector<8x128xf32>
    %c0_10 = arith.constant 0 : index
    %c0_11 = arith.constant 0 : index
    %28 = vector.load %arg6[%c0_10, %c0_11] : memref<1x128xf32, #tpu.memory_space<vmem>>, vector<1x128xf32>
    %cst_12 = arith.constant 0.000000e+00 : f32
    %29 = vector.broadcast %cst_12 : f32 to vector<8x128xf32>
    %30 = arith.select %21, %27, %29 : vector<8x128xi1>, vector<8x128xf32>
    %cst_13 = arith.constant dense<0.000000e+00> : vector<128xf32>
    %31 = vector.multi_reduction <add>, %30, %cst_13 [0] : vector<8x128xf32> to vector<128xf32>
    %32 = vector.shape_cast %31 : vector<128xf32> to vector<1x128xf32>
    %33 = arith.addf %28, %32 : vector<1x128xf32>
    %c0_14 = arith.constant 0 : index
    %c0_15 = arith.constant 0 : index
    %34 = vector.load %arg6[%c0_14, %c0_15] : memref<1x128xf32, #tpu.memory_space<vmem>>, vector<1x128xf32>
    tpu.vector_store %arg6[%c0_14, %c0_15], %33 {strides = array<i32>} : memref<1x128xf32, #tpu.memory_space<vmem>>, vector<1x128xf32>,
    %c0_16 = arith.constant 0 : index
    %c0_17 = arith.constant 0 : index
    %35 = vector.load %arg7[%c0_16, %c0_17] : memref<1x128xf32, #tpu.memory_space<vmem>>, vector<1x128xf32>
    %cst_18 = arith.constant 0.000000e+00 : f32
    %36 = vector.broadcast %cst_18 : f32 to vector<8x128xf32>
    %37 = arith.select %21, %36, %27 : vector<8x128xi1>, vector<8x128xf32>
    %cst_19 = arith.constant dense<0.000000e+00> : vector<128xf32>
    %38 = vector.multi_reduction <add>, %37, %cst_19 [0] : vector<8x128xf32> to vector<128xf32>
    %39 = vector.shape_cast %38 : vector<128xf32> to vector<1x128xf32>
    %40 = arith.addf %35, %39 : vector<1x128xf32>
    %c0_20 = arith.constant 0 : index
    %c0_21 = arith.constant 0 : index
    %41 = vector.load %arg7[%c0_20, %c0_21] : memref<1x128xf32, #tpu.memory_space<vmem>>, vector<1x128xf32>
    tpu.vector_store %arg7[%c0_20, %c0_21], %40 {strides = array<i32>} : memref<1x128xf32, #tpu.memory_space<vmem>>, vector<1x128xf32>,
    %c0_i32_22 = arith.constant 0 : i32
    %42 = arith.cmpi eq, %arg1, %c0_i32_22 : i32
    %43 = arith.extui %42 : i1 to i32
    %c0_i32_23 = arith.constant 0 : i32
    %44 = arith.cmpi ne, %43, %c0_i32_23 : i32
    scf.if %44 {
      %c8_i32 = arith.constant 8 : i32
      %45 = vector.broadcast %c8_i32 : i32 to vector<1x128xi32>
      %46 = arith.cmpi slt, %18, %45 : vector<1x128xi32>
      %c0_24 = arith.constant 0 : index
      %c0_25 = arith.constant 0 : index
      %47 = vector.load %arg6[%c0_24, %c0_25] : memref<1x128xf32, #tpu.memory_space<vmem>>, vector<1x128xf32>
      %cst_26 = arith.constant 0.333333343 : f32
      %48 = vector.broadcast %cst_26 : f32 to vector<1x128xf32>
      %49 = arith.mulf %47, %48 : vector<1x128xf32>
      %cst_27 = arith.constant 5.000000e-01 : f32
      %50 = vector.broadcast %cst_27 : f32 to vector<1x128xf32>
      %51 = arith.subf %50, %49 : vector<1x128xf32>
      %52 = arith.mulf %47, %51 : vector<1x128xf32>
      %cst_28 = arith.constant 1.000000e+00 : f32
      %53 = vector.broadcast %cst_28 : f32 to vector<1x128xf32>
      %54 = arith.subf %53, %52 : vector<1x128xf32>
      %55 = arith.mulf %47, %54 : vector<1x128xf32>
      %cst_29 = arith.constant 9.99999974E-5 : f32
      %56 = vector.broadcast %cst_29 : f32 to vector<1x128xf32>
      %57 = arith.cmpf olt, %47, %56 : vector<1x128xf32>
      %cst_30 = arith.constant 1.000000e+00 : f32
      %58 = vector.broadcast %cst_30 : f32 to vector<1x128xf32>
      %59 = arith.addf %58, %47 : vector<1x128xf32>
      %60 = math.log %59 : vector<1x128xf32>
      %61 = arith.select %57, %55, %60 : vector<1x128xi1>, vector<1x128xf32>
      %c0_31 = arith.constant 0 : index
      %c0_32 = arith.constant 0 : index
      %62 = vector.load %arg7[%c0_31, %c0_32] : memref<1x128xf32, #tpu.memory_space<vmem>>, vector<1x128xf32>
      %cst_33 = arith.constant 0.333333343 : f32
      %63 = vector.broadcast %cst_33 : f32 to vector<1x128xf32>
      %64 = arith.mulf %62, %63 : vector<1x128xf32>
      %cst_34 = arith.constant 5.000000e-01 : f32
      %65 = vector.broadcast %cst_34 : f32 to vector<1x128xf32>
      %66 = arith.subf %65, %64 : vector<1x128xf32>
      %67 = arith.mulf %62, %66 : vector<1x128xf32>
      %cst_35 = arith.constant 1.000000e+00 : f32
      %68 = vector.broadcast %cst_35 : f32 to vector<1x128xf32>
      %69 = arith.subf %68, %67 : vector<1x128xf32>
      %70 = arith.mulf %62, %69 : vector<1x128xf32>
      %cst_36 = arith.constant 9.99999974E-5 : f32
      %71 = vector.broadcast %cst_36 : f32 to vector<1x128xf32>
      %72 = arith.cmpf olt, %62, %71 : vector<1x128xf32>
      %cst_37 = arith.constant 1.000000e+00 : f32
      %73 = vector.broadcast %cst_37 : f32 to vector<1x128xf32>
      %74 = arith.addf %73, %62 : vector<1x128xf32>
      %75 = math.log %74 : vector<1x128xf32>
      %76 = arith.select %72, %70, %75 : vector<1x128xi1>, vector<1x128xf32>
      %cst_38 = arith.constant 0.000000e+00 : f32
      %77 = vector.broadcast %cst_38 : f32 to vector<1x128xf32>
      %78 = arith.select %46, %76, %77 : vector<1x128xi1>, vector<1x128xf32>
      %79 = vector.shape_cast %61 : vector<1x128xf32> to vector<1x1x128xf32>
      %cst_39 = arith.constant dense<0.000000e+00> : vector<1xf32>
      %80 = vector.multi_reduction <add>, %79, %cst_39 [1, 2] : vector<1x1x128xf32> to vector<1xf32>
      %81 = vector.shape_cast %80 : vector<1xf32> to vector<1x1x1xf32>
      %82 = vector.extract %81[0, 0, 0] : f32 from vector<1x1x1xf32>
      %c0_40 = arith.constant 0 : index
      %c0_41 = arith.constant 0 : index
      %83 = memref.load %arg5[%c0_40, %c0_41] : memref<1x2xf32, #tpu.memory_space<smem>>
      memref.store %82, %arg5[%c0_40, %c0_41] : memref<1x2xf32, #tpu.memory_space<smem>>
      %84 = vector.shape_cast %78 : vector<1x128xf32> to vector<1x1x128xf32>
      %cst_42 = arith.constant dense<0.000000e+00> : vector<1xf32>
      %85 = vector.multi_reduction <add>, %84, %cst_42 [1, 2] : vector<1x1x128xf32> to vector<1xf32>
      %86 = vector.shape_cast %85 : vector<1xf32> to vector<1x1x1xf32>
      %87 = vector.extract %86[0, 0, 0] : f32 from vector<1x1x1xf32>
      %c0_43 = arith.constant 0 : index
      %c1 = arith.constant 1 : index
      %88 = memref.load %arg5[%c0_43, %c1] : memref<1x2xf32, #tpu.memory_space<smem>>
      memref.store %87, %arg5[%c0_43, %c1] : memref<1x2xf32, #tpu.memory_space<smem>>
    } else {
    }
    return
  }
  func.func @transform_0(%arg0: i32, %arg1: i32) -> (i32, i32) {
    %c0_i32 = arith.constant 0 : i32
    %c0_i32_0 = arith.constant 0 : i32
    return %arg1, %c0_i32 : i32, i32
  }
  func.func @transform_1(%arg0: i32, %arg1: i32) -> (i32, i32) {
    %c0_i32 = arith.constant 0 : i32
    %c0_i32_0 = arith.constant 0 : i32
    return %arg0, %c0_i32 : i32, i32
  }
  func.func @transform_2(%arg0: i32, %arg1: i32) -> (i32, i32) {
    %c0_i32 = arith.constant 0 : i32
    %c0_i32_0 = arith.constant 0 : i32
    return %arg1, %c0_i32 : i32, i32
  }
  func.func @transform_3(%arg0: i32, %arg1: i32) -> (i32, i32) {
    %c0_i32 = arith.constant 0 : i32
    %c0_i32_0 = arith.constant 0 : i32
    return %arg0, %c0_i32 : i32, i32
  }
}

</mosaic_0001>

<llo_original>
// kernel: tpu_custom_call.1
$region0: #{tpu_custom_call.1}
  #allocation0 [shape = 'u32[]', space=smem, size = 0x4, offset = 0x4, fixed_abs, tag = 'smem constant byte address 0x4 - core index']
  #allocation1 [shape = 'u32[144,128]{1,0:T(1,128)}', space=vmem, size = 0x12000, scoped, tag = 'internal scratch']
  #allocation2 [shape = 'f32[1,128]{1,0:T(1,128)}', space=vmem, size = 0x200, scoped, tag = 'scratch operand']
  #allocation3 [shape = 'f32[1,128]{1,0:T(1,128)}', space=vmem, size = 0x200, scoped, tag = 'scratch operand']
  %s0 = inlined_call_operand.vmem [shape: f32[8,32], index: 0, kind: input, shape index: {}]
  %s1 = inlined_call_operand.vmem [shape: f32[128,32], index: 1, kind: input, shape index: {}]
  %s2 = inlined_call_operand.vmem [shape: s32[8,1], index: 2, kind: input, shape index: {}]
  %s3 = inlined_call_operand.hbm [shape: f32[1,2], index: 3, kind: output, shape index: {}]
  %s4 = sld [smem:[#allocation0]]
  $region30: #{tpu_custom_call.1} parent=0
    _
  %s6 = ssub.s32 1, %s4
  %s7 = scalar_select 0, %s6, %s4
  $region1: #{tpu_custom_call.1} parent=0
    #allocation4 [shape = 'u8[512]{0}', space=smem, size = 0x200, scoped, tag = 'output window, operand 0, single buffered']
    #allocation5 [shape = 's32[1]{0}', space=sflag, size = 0x4, scoped, tag = 'scoped memory for tpu_custom_call.1']
    %8 = vsyncpa [#allocation5], 0
    // Predicated region
    $region2: #{tpu_custom_call.1} parent=1 // pred_check
      _
    $region3: #{tpu_custom_call.1} parent=1 // pred_check_branch
      %10 = sbr.rel (0) target = $region5
    $region4: #{tpu_custom_call.1} parent=1 // pred_region
      _
    $region5: #{tpu_custom_call.1} parent=1 // pred_fallthru
      _
    // Predicated region
    $region6: #{tpu_custom_call.1} parent=1 // pred_check
      _
    $region7: #{tpu_custom_call.1} parent=1 // pred_check_branch
      %12 = sbr.rel (0) target = $region9
    $region8: #{tpu_custom_call.1} parent=1 // pred_region
      _
    $region9: #{tpu_custom_call.1} parent=1 // pred_fallthru
      _
    // Predicated region
    $region10: #{tpu_custom_call.1} parent=1 // pred_check
      _
    $region11: #{tpu_custom_call.1} parent=1 // pred_check_branch
      %14 = sbr.rel (0) target = $region13
    $region12: #{tpu_custom_call.1} parent=1 // pred_region
      _
    $region13: #{tpu_custom_call.1} parent=1 // pred_fallthru
      _
    %p15 = scmp.eq.s32.totalorder 0, 0
    // Predicated region
    $region14: #{tpu_custom_call.1} parent=1 // pred_check
      %p16 = pneg %p15
    $region15: #{tpu_custom_call.1} parent=1 // pred_check_branch
      %18 = sbr.rel (%p16) target = $region17
    $region16: #{tpu_custom_call.1} parent=1 // pred_region
      %19 = vst [vmem:[#allocation2] sm:$0x1] 0.0
      %20 = vst [vmem:[#allocation3] sm:$0x1] 0.0
    $region17: #{tpu_custom_call.1} parent=1 // pred_fallthru
      _
    %v21 = vld [vmem:[%s0] sm:$0xff]
    %v22 = vmul.f32 %v21, %v21
    %vm23 = vcmask 261120
    %v24 = vsel %vm23, %v22, 0.0
    %25 = vadd.xlane.f32.xlu0 %v24
    %v26 = vpop.xlane.xlu0 %25
    %v27 = vmax.f32 %v26, 1e-24
    %v28 = vrsqrt.pop %v27
    %v29 = vmul.f32 %v21, %v28
    %v30 = vld [vmem:[%s1] sm:$0xff]
    %v31 = vld [vmem:[%s1 + $0x8] sm:$0xff]
    %v32 = vld [vmem:[%s1 + $0x10] sm:$0xff]
    %v33 = vld [vmem:[%s1 + $0x18] sm:$0xff]
    %v34 = vld [vmem:[%s1 + $0x20] sm:$0xff]
    %v35 = vld [vmem:[%s1 + $0x28] sm:$0xff]
    %v36 = vld [vmem:[%s1 + $0x30] sm:$0xff]
    %v37 = vld [vmem:[%s1 + $0x38] sm:$0xff]
    %v38 = vld [vmem:[%s1 + $0x40] sm:$0xff]
    %v39 = vld [vmem:[%s1 + $0x48] sm:$0xff]
    %v40 = vld [vmem:[%s1 + $0x50] sm:$0xff]
    %v41 = vld [vmem:[%s1 + $0x58] sm:$0xff]
    %v42 = vld [vmem:[%s1 + $0x60] sm:$0xff]
    %v43 = vld [vmem:[%s1 + $0x68] sm:$0xff]
    %v44 = vld [vmem:[%s1 + $0x70] sm:$0xff]
    %v45 = vld [vmem:[%s1 + $0x78] sm:$0xff]
    %v47 = vsel %vm23, %v29, 0
    %v50 = vsel %vm23, %v30, 0
    %v53 = vsel %vm23, %v31, 0
    %v56 = vsel %vm23, %v32, 0
    %v59 = vsel %vm23, %v33, 0
    %v62 = vsel %vm23, %v34, 0
    %v65 = vsel %vm23, %v35, 0
    %v68 = vsel %vm23, %v36, 0
    %v71 = vsel %vm23, %v37, 0
    %v74 = vsel %vm23, %v38, 0
    %v77 = vsel %vm23, %v39, 0
    %v80 = vsel %vm23, %v40, 0
    %v83 = vsel %vm23, %v41, 0
    %v86 = vsel %vm23, %v42, 0
    %v89 = vsel %vm23, %v43, 0
    %v92 = vsel %vm23, %v44, 0
    %v95 = vsel %vm23, %v45, 0
    %97 = vmatprep.subr.mxu0 0.0
    %98 = vmatpush1.xpose.msra.mxu0 %v50
    %99 = vmatprep.subr.mxu0 0.0
    %100 = vmatpush1.xpose.msra.mxu0 %v53
    %101 = vmatprep.subr.mxu0 0.0
    %102 = vmatpush1.xpose.msra.mxu0 %v56
    %103 = vmatprep.subr.mxu0 0.0
    %104 = vmatpush1.xpose.msra.mxu0 %v59
    %105 = vmatprep.subr.mxu0 0.0
    %106 = vmatpush1.xpose.msra.mxu0 %v62
    %107 = vmatprep.subr.mxu0 0.0
    %108 = vmatpush1.xpose.msra.mxu0 %v65
    %109 = vmatprep.subr.mxu0 0.0
    %110 = vmatpush1.xpose.msra.mxu0 %v68
    %111 = vmatprep.subr.mxu0 0.0
    %112 = vmatpush1.xpose.msra.mxu0 %v71
    %113 = vmatprep.subr.mxu0 0.0
    %114 = vmatpush1.xpose.msra.mxu0 %v74
    %115 = vmatprep.subr.mxu0 0.0
    %116 = vmatpush1.xpose.msra.mxu0 %v77
    %117 = vmatprep.subr.mxu0 0.0
    %118 = vmatpush1.xpose.msra.mxu0 %v80
    %119 = vmatprep.subr.mxu0 0.0
    %120 = vmatpush1.xpose.msra.mxu0 %v83
    %121 = vmatprep.subr.mxu0 0.0
    %122 = vmatpush1.xpose.msra.mxu0 %v86
    %123 = vmatprep.subr.mxu0 0.0
    %124 = vmatpush1.xpose.msra.mxu0 %v89
    %125 = vmatprep.subr.mxu0 0.0
    %126 = vmatpush1.xpose.msra.mxu0 %v92
    %127 = vmatprep.subr.mxu0 0.0
    %128 = vmatpush1.xpose.msra.mxu0 %v95
    %129 = vmatprep.subr.mxu0 0.0
    %130 = vmatpush1.xpose.msra.mxu0 0.0
    %131 = vmatprep.subr.mxu0 0.0
    %132 = vmatpush1.xpose.msra.mxu0 0.0
    %133 = vmatprep.subr.mxu0 0.0
    %134 = vmatpush1.xpose.msra.mxu0 0.0
    %135 = vmatprep.subr.mxu0 0.0
    %136 = vmatpush1.xpose.msra.mxu0 0.0
    %137 = vmatprep.subr.mxu0 0.0
    %138 = vmatpush1.xpose.msra.mxu0 0.0
    %139 = vmatprep.subr.mxu0 0.0
    %140 = vmatpush1.xpose.msra.mxu0 0.0
    %141 = vmatprep.subr.mxu0 0.0
    %142 = vmatpush1.xpose.msra.mxu0 0.0
    %143 = vmatprep.subr.mxu0 0.0
    %144 = vmatpush1.xpose.msra.mxu0 0.0
    %145 = vmatprep.subr.mxu0 0.0
    %146 = vmatpush1.xpose.msra.mxu0 0.0
    %147 = vmatprep.subr.mxu0 0.0
    %148 = vmatpush1.xpose.msra.mxu0 0.0
    %149 = vmatprep.subr.mxu0 0.0
    %150 = vmatpush1.xpose.msra.mxu0 0.0
    %151 = vmatprep.subr.mxu0 0.0
    %152 = vmatpush1.xpose.msra.mxu0 0.0
    %153 = vmatprep.subr.mxu0 0.0
    %154 = vmatpush1.xpose.msra.mxu0 0.0
    %155 = vmatprep.subr.mxu0 0.0
    %156 = vmatpush1.xpose.msra.mxu0 0.0
    %157 = vmatprep.subr.mxu0 0.0
    %158 = vmatpush1.xpose.msra.mxu0 0.0
    %159 = vmatprep.subr.mxu0 0.0
    %160 = vmatpush1.xpose.msra.mxu0 0.0
    %161 = vmatprep.mubr.f32.mxu0 0.0
    %162 = vmatmul.mubr.f32.gmra.mrb[0].mxu0 %v47
    %v163 = vpop.f32.mrb[0].mxu0
    %v164 = vadd.f32 0.0, %v163
    %v165 = vpop.f32.mrb[0].mxu0
    %166 = vdwg.mxu0
    %v167 = vld [vmem:[%s2] sm:$0xff]
    %s168 = smul.u32 0, 128
    %v169 = vlaneseq
    %v170 = vand.u32 %v169, 127
    %v171 = vstv %s168
    %v172 = vadd.s32 %v171, %v170
    %173 = vset.pattern.permute.xlu0 0
    %174 = vperm.xlu0 %173, %v167
    %v175 = vpop.permute.xlu0 %174
    %vm176 = vcmp.eq.s32.totalorder %v172, %v175
    %v177 = vsub.f32 3.2, %v164
    %v178 = vadd.f32 %v164, 3.2
    %v179 = vsel %vm176, %v177, %v178
    %v180 = vmul.f32 %v179, 1.442695
    %v181 = vpow.pop %v180
    %v182 = vld [vmem:[#allocation2] sm:$0x1]
    %v183 = vsel %vm176, %v181, 0.0
    %v184 = vrot.slane %v183, 4
    %v185 = vadd.f32 %v183, %v184
    %v186 = vrot.slane %v185, 2
    %v187 = vadd.f32 %v185, %v186
    %v188 = vrot.slane %v187, 1
    %v189 = vadd.f32 %v187, %v188
    %v190 = vadd.f32 %v182, %v189
    %191 = vst [vmem:[#allocation2] sm:$0x1] %v190
    %v192 = vld [vmem:[#allocation3] sm:$0x1]
    %v193 = vsel %vm176, 0.0, %v181
    %v194 = vrot.slane %v193, 4
    %v195 = vadd.f32 %v193, %v194
    %v196 = vrot.slane %v195, 2
    %v197 = vadd.f32 %v195, %v196
    %v198 = vrot.slane %v197, 1
    %v199 = vadd.f32 %v197, %v198
    %v200 = vadd.f32 %v192, %v199
    %201 = vst [vmem:[#allocation3] sm:$0x1] %v200
    // Predicated region
    $region18: #{tpu_custom_call.1} parent=1 // pred_check
      %p202 = pneg %p15
    $region19: #{tpu_custom_call.1} parent=1 // pred_check_branch
      %204 = sbr.rel (%p202) target = $region21
    $region20: #{tpu_custom_call.1} parent=1 // pred_region
      %vm205 = vcmp.lt.s32.totalorder %v172, 8
      %v206 = vld [vmem:[#allocation2] sm:$0x1]
      %v207 = vmul.f32 %v206, 0.33333334
      %v208 = vsub.f32 0.5, %v207
      %v209 = vmul.f32 %v206, %v208
      %v210 = vsub.f32 1.0, %v209
      %v211 = vmul.f32 %v206, %v210
      %vm212 = vcmp.lt.f32.partialorder %v206, 0.0001
      %v213 = vadd.f32 %v206, 1.0
      %v214 = vlog2.pop %v213
      %v215 = vmul.f32 %v214, 0.6931472
      %v216 = vsel %vm212, %v211, %v215
      %v217 = vld [vmem:[#allocation3] sm:$0x1]
      %v218 = vmul.f32 %v217, 0.33333334
      %v219 = vsub.f32 0.5, %v218
      %v220 = vmul.f32 %v217, %v219
      %v221 = vsub.f32 1.0, %v220
      %v222 = vmul.f32 %v217, %v221
      %vm223 = vcmp.lt.f32.partialorder %v217, 0.0001
      %v224 = vadd.f32 %v217, 1.0
      %v225 = vlog2.pop %v224
      %v226 = vmul.f32 %v225, 0.6931472
      %v227 = vsel %vm223, %v222, %v226
      %v228 = vsel %vm205, %v227, 0.0
      %vm229 = vcmask 1040384
      %v230 = vsel %vm229, %v216, 0.0
      %231 = vadd.xlane.f32.xlu0 %v230
      %v232 = vpop.xlane.xlu0 %231
      %v233 = vrot.slane %v232, 4
      %v234 = vadd.f32 %v232, %v233
      %v235 = vrot.slane %v234, 2
      %v236 = vadd.f32 %v234, %v235
      %v237 = vrot.slane %v236, 1
      %v238 = vadd.f32 %v236, %v237
      %s239 = vtos %v238
      %s240 = scalar_lea.smem [#allocation4], 0
      %241 = sst [smem:[%s240]] %s239
      %v242 = vsel %vm229, %v228, 0.0
      %243 = vadd.xlane.f32.xlu0 %v242
      %v244 = vpop.xlane.xlu0 %243
      %v245 = vrot.slane %v244, 4
      %v246 = vadd.f32 %v244, %v245
      %v247 = vrot.slane %v246, 2
      %v248 = vadd.f32 %v246, %v247
      %v249 = vrot.slane %v248, 1
      %v250 = vadd.f32 %v248, %v249
      %s251 = vtos %v250
      %s252 = scalar_lea.smem [#allocation4], 1
      %253 = sst [smem:[%s252]] %s251
    $region21: #{tpu_custom_call.1} parent=1 // pred_fallthru
      _
    // Predicated region
    $region22: #{tpu_custom_call.1} parent=1 // pred_check
      _
    $region23: #{tpu_custom_call.1} parent=1 // pred_check_branch
      %255 = sbr.rel (0) target = $region25
    $region24: #{tpu_custom_call.1} parent=1 // pred_region
      %s257 = ssub.s32 16, 16
      %258 = vsyncadd [#allocation5], %s257
      %261 = dma.smem_to_hbm [#allocation4], 16, %s3, [#allocation5]
    $region25: #{tpu_custom_call.1} parent=1 // pred_fallthru
      _
    // Predicated region
    $region26: #{tpu_custom_call.1} parent=1 // pred_check
      _
    $region27: #{tpu_custom_call.1} parent=1 // pred_check_branch
      %263 = sbr.rel (0) target = $region29
    $region28: #{tpu_custom_call.1} parent=1 // pred_region
      %264 = dma.done [#allocation5], 16
    $region29: #{tpu_custom_call.1} parent=1 // pred_fallthru
      _
    %265 = sfence
    %266 = vsyncpa [#allocation5], 1

</llo_original>
